<compile_context>
chip_gen: v6e
topology: v6e:2x2x1
jax: 0.10.0
libtpu: 0.0.40
codegen_flags: <defaults>
</compile_context>

<pallas_src>
import jax
import jax.numpy as jnp
from jax import lax
from jax.experimental import pallas as pl
from jax.experimental.pallas import tpu as pltpu


def _round_up(x, m):
    return ((x + m - 1) // m) * m


def _doctor_encoder_kernel(ids_ref, table_ref, out_ref):
    # ids_ref:   [TILE_N, 1]        int32    (VMEM)
    # table_ref: [num_doctors, D]   f32/bf16 (VMEM, resident: constant index_map)
    # out_ref:   [TILE_N, D]        same dtype as table
    ids = ids_ref[...]                                      # [TILE_N, 1]
    tile_n = out_ref.shape[0]
    num_doctors = table_ref.shape[0]

    # One-hot gather on the MXU: a single compare pass builds the one-hot in
    # the table's float dtype (0/1 exact in bf16/f32; never int -- v7x MXU has
    # no integer path), then one [TILE_N, V] x [V, D] matmul, f32 accumulate.
    iota = lax.broadcasted_iota(jnp.int32, (tile_n, num_doctors), 1)
    one_hot = (iota == ids).astype(table_ref.dtype)         # [TILE_N, V]
    gathered = jnp.dot(
        one_hot,
        table_ref[...],
        preferred_element_type=jnp.float32,
        precision=lax.Precision.HIGHEST,   # full-precision passes for f32 tables
    )
    out_ref[...] = gathered.astype(out_ref.dtype)


def doctor_encoder(doctor_ids, embedding_table, *, tile_n=2048):
    """Pallas equivalent of DoctorEncoder.forward.

    doctor_ids:       integer array of any shape (e.g. [B, S])
    embedding_table:  [num_doctors, n_embd]
    returns:          doctor_ids.shape + (n_embd,) array, dtype of the table
    """
    orig_shape = doctor_ids.shape
    ids_flat = doctor_ids.reshape(-1).astype(jnp.int32)
    n = ids_flat.shape[0]
    num_doctors, n_embd = embedding_table.shape
    itemsize = jnp.dtype(embedding_table.dtype).itemsize

    # ---- tile size -------------------------------------------------------
    tile_n = int(tile_n)
    # Keep each output block <= ~4 MiB so double-buffering fits comfortably
    # even inside v7x's 64 MiB VMEM (v5e/v6e have 128 MiB).
    tile_n = min(tile_n, max(512, (4 << 20) // (n_embd * itemsize)))
    if n <= tile_n:
        if n >= 512:
            # Split into >=2 grid steps so v7x's two TensorCores both get work.
            tile_n = _round_up(pl.cdiv(n, 2), 8)
        else:
            # Tiny input: one full-extent block (always a legal block shape).
            tile_n = n
    else:
        tile_n = max(8, (tile_n // 8) * 8)                  # sublane-aligned

    grid = (pl.cdiv(n, tile_n),)                            # ragged tail handled by Pallas
    ids_2d = ids_flat.reshape(n, 1)

    # ---- explicit VMEM budget (double-buffered blocks + resident table) ----
    lane = 128
    ids_block_bytes = tile_n * lane * 4                     # (TILE_N, 1) lane-pads to 128
    out_block_bytes = tile_n * n_embd * itemsize
    table_bytes = _round_up(num_doctors, 8) * _round_up(n_embd, lane) * itemsize
    onehot_bytes = tile_n * _round_up(num_doctors, lane) * itemsize
    acc_bytes = tile_n * n_embd * 4                         # f32 matmul accumulator
    vmem_limit = int(min(
        2 * ids_block_bytes
        + 2 * out_block_bytes
        + 2 * table_bytes
        + onehot_bytes
        + acc_bytes
        + (8 << 20),                                        # headroom
        56 << 20,                                           # stay inside v7x VMEM
    ))

    out = pl.pallas_call(
        _doctor_encoder_kernel,
        out_shape=jax.ShapeDtypeStruct((n, n_embd), embedding_table.dtype),
        grid_spec=pltpu.PrefetchScalarGridSpec(
            num_scalar_prefetch=0,
            grid=grid,
            in_specs=[
                # ids: one (TILE_N, 1) block per grid step.
                pl.BlockSpec((tile_n, 1), lambda i: (i, 0)),
                # table: constant index_map -> fetched once, stays resident.
                pl.BlockSpec((num_doctors, n_embd), lambda i: (0, 0)),
            ],
            # Lane-dense output blocks (last dim = n_embd) -> unmasked stores.
            # Default double-buffering already overlaps writeback; deepen with
            # pipeline_mode=pl.Buffered(3) only if the profile shows exposed
            # store DMA.
            out_specs=pl.BlockSpec((tile_n, n_embd), lambda i: (i, 0)),
        ),
        compiler_params=pltpu.CompilerParams(
            dimension_semantics=("parallel",),              # shard N across TCs (v7x)
            vmem_limit_bytes=vmem_limit,
        ),
    )(ids_2d, embedding_table)

    return out.reshape(*orig_shape, n_embd)


if __name__ == "__main__":
    # Configuration consistent with the module:
    #   args.num_doctors = 16, config.n_embd = 128.
    num_doctors = 16
    n_embd = 128

    key = jax.random.PRNGKey(0)
    k_tab, k_ids_a, k_ids_b = jax.random.split(key, 3)

    # Deterministic "parameter init" (nn.Embedding default is N(0, 1)).
    embedding_table = jax.random.normal(
        k_tab, (num_doctors, n_embd), dtype=jnp.float32
    )

    # Case 1: small [batch=2, seq=8] -> single grid step.
    ids_a = jax.random.randint(
        k_ids_a, (2, 8), minval=0, maxval=num_doctors, dtype=jnp.int32
    )
    out_a = jax.block_until_ready(doctor_encoder(ids_a, embedding_table))
    ref_a = jnp.take(embedding_table, ids_a, axis=0)
    assert out_a.shape == (2, 8, n_embd)
    # Tolerance covers the multi-pass f32 MXU decomposition.
    assert jnp.allclose(out_a, ref_a, rtol=1e-4, atol=1e-5), "mismatch (case 1)"

    # Case 2: [batch=4, seq=275] -> n=1100: two grid steps (megacore-splittable)
    # with a ragged last block, exercising the no-pad/no-slice path.
    ids_b = jax.random.randint(
        k_ids_b, (4, 275), minval=0, maxval=num_doctors, dtype=jnp.int32
    )
    out_b = jax.block_until_ready(doctor_encoder(ids_b, embedding_table))
    ref_b = jnp.take(embedding_table, ids_b, axis=0)
    assert out_b.shape == (4, 275, n_embd)
    assert jnp.allclose(out_b, ref_b, rtol=1e-4, atol=1e-5), "mismatch (case 2)"

    print("KERNEL_OK")
</pallas_src>

<mosaic_0001>
module attributes {stable_mosaic.version = 11 : i64} {
  func.func @_doctor_encoder_kernel(%arg0: i32, %arg1: memref<16x1xi32, #tpu.memory_space<vmem>>, %arg2: memref<16x128xf32, #tpu.memory_space<vmem>>, %arg3: memref<16x128xf32, #tpu.memory_space<vmem>>) attributes {dimension_semantics = [#tpu.dimension_semantics<parallel>], iteration_bounds = array<i64: 1>, scalar_prefetch = 0 : i64, scratch_operands = 0 : i64, tpu.core_type = #tpu.core_type<tc>, window_params = [{transform_indices = @transform_0, window_bounds = array<i64: 16, 1>}, {pipeline_mode = #tpu.pipeline_mode<synchronous>, transform_indices = @transform_1, window_bounds = array<i64: 16, 128>}, {transform_indices = @transform_2, window_bounds = array<i64: 16, 128>}]} {
    %c0 = arith.constant 0 : index
    %c0_0 = arith.constant 0 : index
    %0 = vector.load %arg1[%c0, %c0_0] : memref<16x1xi32, #tpu.memory_space<vmem>>, vector<16x1xi32>
    %1 = tpu.iota {dimensions = array<i32: 1>} : vector<16x16xi32>
    %2 = vector.broadcast %0 : vector<16x1xi32> to vector<16x16xi32>
    %3 = arith.cmpi eq, %1, %2 : vector<16x16xi32>
    %4 = arith.extui %3 : vector<16x16xi1> to vector<16x16xi32>
    %5 = arith.sitofp %4 : vector<16x16xi32> to vector<16x16xf32>
    %c0_1 = arith.constant 0 : index
    %c0_2 = arith.constant 0 : index
    %6 = vector.load %arg2[%c0_1, %c0_2] : memref<16x128xf32, #tpu.memory_space<vmem>>, vector<16x128xf32>
    %cst = arith.constant dense<0.000000e+00> : vector<16x128xf32>
    %7 = tpu.matmul %5, %6, %cst {dimension_numbers = #tpu.dot_dimension_numbers<[1], [0], [0], [1], [0, 0, 1, 1], [], []>, precision = #tpu.contract_precision<fp32>} : vector<16x16xf32>, vector<16x128xf32>, vector<16x128xf32> -> vector<16x128xf32>
    %c0_3 = arith.constant 0 : index
    %c0_4 = arith.constant 0 : index
    %8 = vector.load %arg3[%c0_3, %c0_4] : memref<16x128xf32, #tpu.memory_space<vmem>>, vector<16x128xf32>
    tpu.vector_store %arg3[%c0_3, %c0_4], %7 {strides = array<i32>} : memref<16x128xf32, #tpu.memory_space<vmem>>, vector<16x128xf32>,
    return
  }
  func.func @transform_0(%arg0: i32) -> (i32, i32) {
    %c0_i32 = arith.constant 0 : i32
    %c0_i32_0 = arith.constant 0 : i32
    return %arg0, %c0_i32 : i32, i32
  }
  func.func @transform_1(%arg0: i32) -> (i32, i32) {
    %c0_i32 = arith.constant 0 : i32
    %c0_i32_0 = arith.constant 0 : i32
    %c0_i32_1 = arith.constant 0 : i32
    return %c0_i32, %c0_i32_0 : i32, i32
  }
  func.func @transform_2(%arg0: i32) -> (i32, i32) {
    %c0_i32 = arith.constant 0 : i32
    %c0_i32_0 = arith.constant 0 : i32
    return %arg0, %c0_i32 : i32, i32
  }
}

</mosaic_0001>

<llo_original>
// kernel: tpu_custom_call.1
$region0: #{tpu_custom_call.1}
  #allocation0 [shape = 'u32[]', space=smem, size = 0x4, offset = 0x4, fixed_abs, tag = 'smem constant byte address 0x4 - core index']
  #allocation1 [shape = 'u32[144,128]{1,0:T(1,128)}', space=vmem, size = 0x12000, scoped, tag = 'internal scratch']
  %s0 = inlined_call_operand.vmem [shape: s32[16,1], index: 0, kind: input, shape index: {}]
  %s1 = inlined_call_operand.vmem [shape: f32[16,128], index: 1, kind: input, shape index: {}]
  %s2 = inlined_call_operand.hbm [shape: f32[16,128], index: 2, kind: output, shape index: {}]
  %s3 = sld [smem:[#allocation0]]
  $region18: #{tpu_custom_call.1} parent=0
    _
  %s5 = ssub.s32 1, %s3
  %s6 = scalar_select 0, %s5, %s3
  $region1: #{tpu_custom_call.1} parent=0
    #allocation2 [shape = 'u8[8192]{0}', space=vmem, size = 0x2000, scoped, tag = 'output window, operand 0, single buffered']
    #allocation3 [shape = 's32[1]{0}', space=sflag, size = 0x4, scoped, tag = 'scoped memory for tpu_custom_call.1']
    %7 = vsyncpa [#allocation3], 0
    // Predicated region
    $region2: #{tpu_custom_call.1} parent=1 // pred_check
      _
    $region3: #{tpu_custom_call.1} parent=1 // pred_check_branch
      %9 = sbr.rel (0) target = $region5
    $region4: #{tpu_custom_call.1} parent=1 // pred_region
      _
    $region5: #{tpu_custom_call.1} parent=1 // pred_fallthru
      _
    // Predicated region
    $region6: #{tpu_custom_call.1} parent=1 // pred_check
      _
    $region7: #{tpu_custom_call.1} parent=1 // pred_check_branch
      %11 = sbr.rel (0) target = $region9
    $region8: #{tpu_custom_call.1} parent=1 // pred_region
      _
    $region9: #{tpu_custom_call.1} parent=1 // pred_fallthru
      _
    %v12 = vld [vmem:[%s0] sm:$0xff]
    %v13 = vld [vmem:[%s0 + $0x8] sm:$0xff]
    %v14 = vlaneseq
    %v15 = vand.u32 %v14, 127
    %16 = vset.pattern.permute.xlu0 0
    %17 = vperm.xlu0 %16, %v12
    %v18 = vpop.permute.xlu0 %17
    %19 = vset.pattern.permute.xlu0 0
    %20 = vperm.xlu0 %19, %v13
    %v21 = vpop.permute.xlu0 %20
    %vm22 = vcmp.eq.s32.totalorder %v15, %v18
    %vm23 = vcmp.eq.s32.totalorder %v15, %v21
    %v24 = vsel %vm22, 1, 0
    %v25 = vsel %vm23, 1, 0
    %v26 = vcvt.s32.f32 %v24
    %v27 = vcvt.s32.f32 %v25
    %v28 = vld [vmem:[%s1] sm:$0xff]
    %v29 = vld [vmem:[%s1 + $0x8] sm:$0xff]
    %vm30 = vcmask 130048
    %v32 = vsel %vm30, %v26, 0
    %v35 = vsel %vm30, %v27, 0
    %37 = vmatprep.subr.mxu0 0.0
    %38 = vmatpush1.msra.mxu0 0.0
    %39 = vmatprep.subr.mxu0 0.0
    %40 = vmatpush1.msra.mxu0 0.0
    %41 = vmatprep.subr.mxu0 0.0
    %42 = vmatpush1.msra.mxu0 0.0
    %43 = vmatprep.subr.mxu0 0.0
    %44 = vmatpush1.msra.mxu0 0.0
    %45 = vmatprep.subr.mxu0 0.0
    %46 = vmatpush1.msra.mxu0 0.0
    %47 = vmatprep.subr.mxu0 0.0
    %48 = vmatpush1.msra.mxu0 0.0
    %49 = vmatprep.subr.mxu0 0.0
    %50 = vmatpush1.msra.mxu0 0.0
    %51 = vmatprep.subr.mxu0 0.0
    %52 = vmatpush1.msra.mxu0 0.0
    %53 = vmatprep.subr.mxu0 0.0
    %54 = vmatpush1.msra.mxu0 0.0
    %55 = vmatprep.subr.mxu0 0.0
    %56 = vmatpush1.msra.mxu0 0.0
    %57 = vmatprep.subr.mxu0 0.0
    %58 = vmatpush1.msra.mxu0 0.0
    %59 = vmatprep.subr.mxu0 0.0
    %60 = vmatpush1.msra.mxu0 0.0
    %61 = vmatprep.subr.mxu0 0.0
    %62 = vmatpush1.msra.mxu0 0.0
    %63 = vmatprep.subr.mxu0 0.0
    %64 = vmatpush1.msra.mxu0 0.0
    %65 = vmatprep.subr.mxu0 0.0
    %v66 = vand.u32 %v29, 4294901760
    %67 = vmatpush1.msra.mxu0 %v66
    %68 = vmatprep.subr.mxu0 0.0
    %v69 = vand.u32 %v28, 4294901760
    %70 = vmatpush1.msra.mxu0 %v69
    %71 = vmatprep.subr.mxu0 0.0
    %72 = vmatpush2.msra.mxu0 0.0
    %73 = vmatprep.subr.mxu0 0.0
    %74 = vmatpush2.msra.mxu0 0.0
    %75 = vmatprep.subr.mxu0 0.0
    %76 = vmatpush2.msra.mxu0 0.0
    %77 = vmatprep.subr.mxu0 0.0
    %78 = vmatpush2.msra.mxu0 0.0
    %79 = vmatprep.subr.mxu0 0.0
    %80 = vmatpush2.msra.mxu0 0.0
    %81 = vmatprep.subr.mxu0 0.0
    %82 = vmatpush2.msra.mxu0 0.0
    %83 = vmatprep.subr.mxu0 0.0
    %84 = vmatpush2.msra.mxu0 0.0
    %85 = vmatprep.subr.mxu0 0.0
    %86 = vmatpush2.msra.mxu0 0.0
    %87 = vmatprep.subr.mxu0 0.0
    %88 = vmatpush2.msra.mxu0 0.0
    %89 = vmatprep.subr.mxu0 0.0
    %90 = vmatpush2.msra.mxu0 0.0
    %91 = vmatprep.subr.mxu0 0.0
    %92 = vmatpush2.msra.mxu0 0.0
    %93 = vmatprep.subr.mxu0 0.0
    %94 = vmatpush2.msra.mxu0 0.0
    %95 = vmatprep.subr.mxu0 0.0
    %96 = vmatpush2.msra.mxu0 0.0
    %97 = vmatprep.subr.mxu0 0.0
    %98 = vmatpush2.msra.mxu0 0.0
    %99 = vmatprep.subr.mxu0 0.0
    %100 = vmatpush2.msra.mxu0 0.0
    %101 = vmatprep.subr.mxu0 0.0
    %102 = vmatpush2.msra.mxu0 0.0
    %103 = vmatprep.mubr.f32.mxu0 0.0
    %v104 = vand.u32 %v32, 4294901760
    %v105 = vsub.f32 %v32, %v104
    %v106 = vand.u32 %v105, 4294901760
    %v107 = vsub.f32 %v105, %v106
    %v108 = vand.u32 %v107, 4294901760
    %109 = vmatmul.mubr.f32.gmra.mxu0 %v108
    %v110 = vpop.f32.mrf.mxu0
    %v111 = vadd.f32 0.0, %v110
    %v112 = vpop.f32.mrf.mxu0
    %113 = vmatprep.mubr.f32.mxu0 0.0
    %v114 = vand.u32 %v35, 4294901760
    %v115 = vsub.f32 %v35, %v114
    %v116 = vand.u32 %v115, 4294901760
    %v117 = vsub.f32 %v115, %v116
    %v118 = vand.u32 %v117, 4294901760
    %119 = vmatmul.mubr.f32.gmra.mxu0 %v118
    %v120 = vpop.f32.mrf.mxu0
    %v121 = vadd.f32 0.0, %v120
    %v122 = vpop.f32.mrf.mxu0
    %123 = vdwg.mxu0
    %124 = vmatprep.subr.mxu0 0.0
    %125 = vmatpush1.msra.mxu0 0.0
    %126 = vmatprep.subr.mxu0 0.0
    %127 = vmatpush1.msra.mxu0 0.0
    %128 = vmatprep.subr.mxu0 0.0
    %129 = vmatpush1.msra.mxu0 0.0
    %130 = vmatprep.subr.mxu0 0.0
    %131 = vmatpush1.msra.mxu0 0.0
    %132 = vmatprep.subr.mxu0 0.0
    %133 = vmatpush1.msra.mxu0 0.0
    %134 = vmatprep.subr.mxu0 0.0
    %135 = vmatpush1.msra.mxu0 0.0
    %136 = vmatprep.subr.mxu0 0.0
    %137 = vmatpush1.msra.mxu0 0.0
    %138 = vmatprep.subr.mxu0 0.0
    %139 = vmatpush1.msra.mxu0 0.0
    %140 = vmatprep.subr.mxu0 0.0
    %141 = vmatpush1.msra.mxu0 0.0
    %142 = vmatprep.subr.mxu0 0.0
    %143 = vmatpush1.msra.mxu0 0.0
    %144 = vmatprep.subr.mxu0 0.0
    %145 = vmatpush1.msra.mxu0 0.0
    %146 = vmatprep.subr.mxu0 0.0
    %147 = vmatpush1.msra.mxu0 0.0
    %148 = vmatprep.subr.mxu0 0.0
    %149 = vmatpush1.msra.mxu0 0.0
    %150 = vmatprep.subr.mxu0 0.0
    %151 = vmatpush1.msra.mxu0 0.0
    %152 = vmatprep.subr.mxu0 0.0
    %v153 = vand.u32 %v29, 4294901760
    %v154 = vsub.f32 %v29, %v153
    %v155 = vand.u32 %v154, 4294901760
    %v156 = vsub.f32 %v154, %v155
    %v157 = vand.u32 %v156, 4294901760
    %158 = vmatpush1.msra.mxu0 %v157
    %159 = vmatprep.subr.mxu0 0.0
    %v160 = vand.u32 %v28, 4294901760
    %v161 = vsub.f32 %v28, %v160
    %v162 = vand.u32 %v161, 4294901760
    %v163 = vsub.f32 %v161, %v162
    %v164 = vand.u32 %v163, 4294901760
    %165 = vmatpush1.msra.mxu0 %v164
    %166 = vmatprep.subr.mxu0 0.0
    %167 = vmatpush2.msra.mxu0 0.0
    %168 = vmatprep.subr.mxu0 0.0
    %169 = vmatpush2.msra.mxu0 0.0
    %170 = vmatprep.subr.mxu0 0.0
    %171 = vmatpush2.msra.mxu0 0.0
    %172 = vmatprep.subr.mxu0 0.0
    %173 = vmatpush2.msra.mxu0 0.0
    %174 = vmatprep.subr.mxu0 0.0
    %175 = vmatpush2.msra.mxu0 0.0
    %176 = vmatprep.subr.mxu0 0.0
    %177 = vmatpush2.msra.mxu0 0.0
    %178 = vmatprep.subr.mxu0 0.0
    %179 = vmatpush2.msra.mxu0 0.0
    %180 = vmatprep.subr.mxu0 0.0
    %181 = vmatpush2.msra.mxu0 0.0
    %182 = vmatprep.subr.mxu0 0.0
    %183 = vmatpush2.msra.mxu0 0.0
    %184 = vmatprep.subr.mxu0 0.0
    %185 = vmatpush2.msra.mxu0 0.0
    %186 = vmatprep.subr.mxu0 0.0
    %187 = vmatpush2.msra.mxu0 0.0
    %188 = vmatprep.subr.mxu0 0.0
    %189 = vmatpush2.msra.mxu0 0.0
    %190 = vmatprep.subr.mxu0 0.0
    %191 = vmatpush2.msra.mxu0 0.0
    %192 = vmatprep.subr.mxu0 0.0
    %193 = vmatpush2.msra.mxu0 0.0
    %194 = vmatprep.subr.mxu0 0.0
    %195 = vmatpush2.msra.mxu0 0.0
    %196 = vmatprep.subr.mxu0 0.0
    %197 = vmatpush2.msra.mxu0 0.0
    %198 = vmatprep.mubr.f32.mxu0 0.0
    %v199 = vand.u32 %v32, 4294901760
    %200 = vmatmul.mubr.f32.gmra.mxu0 %v199
    %v201 = vpop.f32.mrf.mxu0
    %v202 = vadd.f32 %v111, %v201
    %v203 = vpop.f32.mrf.mxu0
    %204 = vmatprep.mubr.f32.mxu0 0.0
    %v205 = vand.u32 %v35, 4294901760
    %206 = vmatmul.mubr.f32.gmra.mxu0 %v205
    %v207 = vpop.f32.mrf.mxu0
    %v208 = vadd.f32 %v121, %v207
    %v209 = vpop.f32.mrf.mxu0
    %210 = vdwg.mxu0
    %211 = vmatprep.subr.mxu0 0.0
    %212 = vmatpush1.msra.mxu0 0.0
    %213 = vmatprep.subr.mxu0 0.0
    %214 = vmatpush1.msra.mxu0 0.0
    %215 = vmatprep.subr.mxu0 0.0
    %216 = vmatpush1.msra.mxu0 0.0
    %217 = vmatprep.subr.mxu0 0.0
    %218 = vmatpush1.msra.mxu0 0.0
    %219 = vmatprep.subr.mxu0 0.0
    %220 = vmatpush1.msra.mxu0 0.0
    %221 = vmatprep.subr.mxu0 0.0
    %222 = vmatpush1.msra.mxu0 0.0
    %223 = vmatprep.subr.mxu0 0.0
    %224 = vmatpush1.msra.mxu0 0.0
    %225 = vmatprep.subr.mxu0 0.0
    %226 = vmatpush1.msra.mxu0 0.0
    %227 = vmatprep.subr.mxu0 0.0
    %228 = vmatpush1.msra.mxu0 0.0
    %229 = vmatprep.subr.mxu0 0.0
    %230 = vmatpush1.msra.mxu0 0.0
    %231 = vmatprep.subr.mxu0 0.0
    %232 = vmatpush1.msra.mxu0 0.0
    %233 = vmatprep.subr.mxu0 0.0
    %234 = vmatpush1.msra.mxu0 0.0
    %235 = vmatprep.subr.mxu0 0.0
    %236 = vmatpush1.msra.mxu0 0.0
    %237 = vmatprep.subr.mxu0 0.0
    %238 = vmatpush1.msra.mxu0 0.0
    %239 = vmatprep.subr.mxu0 0.0
    %v240 = vand.u32 %v29, 4294901760
    %v241 = vsub.f32 %v29, %v240
    %242 = vmatpush1.msra.mxu0 %v241
    %243 = vmatprep.subr.mxu0 0.0
    %v244 = vand.u32 %v28, 4294901760
    %v245 = vsub.f32 %v28, %v244
    %246 = vmatpush1.msra.mxu0 %v245
    %247 = vmatprep.subr.mxu0 0.0
    %248 = vmatpush2.msra.mxu0 0.0
    %249 = vmatprep.subr.mxu0 0.0
    %250 = vmatpush2.msra.mxu0 0.0
    %251 = vmatprep.subr.mxu0 0.0
    %252 = vmatpush2.msra.mxu0 0.0
    %253 = vmatprep.subr.mxu0 0.0
    %254 = vmatpush2.msra.mxu0 0.0
    %255 = vmatprep.subr.mxu0 0.0
    %256 = vmatpush2.msra.mxu0 0.0
    %257 = vmatprep.subr.mxu0 0.0
    %258 = vmatpush2.msra.mxu0 0.0
    %259 = vmatprep.subr.mxu0 0.0
    %260 = vmatpush2.msra.mxu0 0.0
    %261 = vmatprep.subr.mxu0 0.0
    %262 = vmatpush2.msra.mxu0 0.0
    %263 = vmatprep.subr.mxu0 0.0
    %264 = vmatpush2.msra.mxu0 0.0
    %265 = vmatprep.subr.mxu0 0.0
    %266 = vmatpush2.msra.mxu0 0.0
    %267 = vmatprep.subr.mxu0 0.0
    %268 = vmatpush2.msra.mxu0 0.0
    %269 = vmatprep.subr.mxu0 0.0
    %270 = vmatpush2.msra.mxu0 0.0
    %271 = vmatprep.subr.mxu0 0.0
    %272 = vmatpush2.msra.mxu0 0.0
    %273 = vmatprep.subr.mxu0 0.0
    %274 = vmatpush2.msra.mxu0 0.0
    %275 = vmatprep.subr.mxu0 0.0
    %276 = vmatpush2.msra.mxu0 0.0
    %277 = vmatprep.subr.mxu0 0.0
    %278 = vmatpush2.msra.mxu0 0.0
    %279 = vmatprep.mubr.f32.mxu0 0.0
    %v280 = vand.u32 %v32, 4294901760
    %v281 = vsub.f32 %v32, %v280
    %282 = vmatmul.mubr.f32.gmra.mxu0 %v281
    %v283 = vpop.f32.mrf.mxu0
    %v284 = vadd.f32 %v202, %v283
    %v285 = vpop.f32.mrf.mxu0
    %286 = vmatprep.mubr.f32.mxu0 0.0
    %v287 = vand.u32 %v35, 4294901760
    %v288 = vsub.f32 %v35, %v287
    %289 = vmatmul.mubr.f32.gmra.mxu0 %v288
    %v290 = vpop.f32.mrf.mxu0
    %v291 = vadd.f32 %v208, %v290
    %v292 = vpop.f32.mrf.mxu0
    %293 = vdwg.mxu0
    %294 = vmatprep.subr.mxu0 0.0
    %295 = vmatpush1.msra.mxu0 0.0
    %296 = vmatprep.subr.mxu0 0.0
    %297 = vmatpush1.msra.mxu0 0.0
    %298 = vmatprep.subr.mxu0 0.0
    %299 = vmatpush1.msra.mxu0 0.0
    %300 = vmatprep.subr.mxu0 0.0
    %301 = vmatpush1.msra.mxu0 0.0
    %302 = vmatprep.subr.mxu0 0.0
    %303 = vmatpush1.msra.mxu0 0.0
    %304 = vmatprep.subr.mxu0 0.0
    %305 = vmatpush1.msra.mxu0 0.0
    %306 = vmatprep.subr.mxu0 0.0
    %307 = vmatpush1.msra.mxu0 0.0
    %308 = vmatprep.subr.mxu0 0.0
    %309 = vmatpush1.msra.mxu0 0.0
    %310 = vmatprep.subr.mxu0 0.0
    %311 = vmatpush1.msra.mxu0 0.0
    %312 = vmatprep.subr.mxu0 0.0
    %313 = vmatpush1.msra.mxu0 0.0
    %314 = vmatprep.subr.mxu0 0.0
    %315 = vmatpush1.msra.mxu0 0.0
    %316 = vmatprep.subr.mxu0 0.0
    %317 = vmatpush1.msra.mxu0 0.0
    %318 = vmatprep.subr.mxu0 0.0
    %319 = vmatpush1.msra.mxu0 0.0
    %320 = vmatprep.subr.mxu0 0.0
    %321 = vmatpush1.msra.mxu0 0.0
    %322 = vmatprep.subr.mxu0 0.0
    %v323 = vand.u32 %v29, 4294901760
    %324 = vmatpush1.msra.mxu0 %v323
    %325 = vmatprep.subr.mxu0 0.0
    %v326 = vand.u32 %v28, 4294901760
    %327 = vmatpush1.msra.mxu0 %v326
    %328 = vmatprep.subr.mxu0 0.0
    %329 = vmatpush2.msra.mxu0 0.0
    %330 = vmatprep.subr.mxu0 0.0
    %331 = vmatpush2.msra.mxu0 0.0
    %332 = vmatprep.subr.mxu0 0.0
    %333 = vmatpush2.msra.mxu0 0.0
    %334 = vmatprep.subr.mxu0 0.0
    %335 = vmatpush2.msra.mxu0 0.0
    %336 = vmatprep.subr.mxu0 0.0
    %337 = vmatpush2.msra.mxu0 0.0
    %338 = vmatprep.subr.mxu0 0.0
    %339 = vmatpush2.msra.mxu0 0.0
    %340 = vmatprep.subr.mxu0 0.0
    %341 = vmatpush2.msra.mxu0 0.0
    %342 = vmatprep.subr.mxu0 0.0
    %343 = vmatpush2.msra.mxu0 0.0
    %344 = vmatprep.subr.mxu0 0.0
    %345 = vmatpush2.msra.mxu0 0.0
    %346 = vmatprep.subr.mxu0 0.0
    %347 = vmatpush2.msra.mxu0 0.0
    %348 = vmatprep.subr.mxu0 0.0
    %349 = vmatpush2.msra.mxu0 0.0
    %350 = vmatprep.subr.mxu0 0.0
    %351 = vmatpush2.msra.mxu0 0.0
    %352 = vmatprep.subr.mxu0 0.0
    %353 = vmatpush2.msra.mxu0 0.0
    %354 = vmatprep.subr.mxu0 0.0
    %355 = vmatpush2.msra.mxu0 0.0
    %356 = vmatprep.subr.mxu0 0.0
    %357 = vmatpush2.msra.mxu0 0.0
    %358 = vmatprep.subr.mxu0 0.0
    %359 = vmatpush2.msra.mxu0 0.0
    %360 = vmatprep.mubr.f32.mxu0 0.0
    %v361 = vand.u32 %v32, 4294901760
    %v362 = vsub.f32 %v32, %v361
    %v363 = vand.u32 %v362, 4294901760
    %364 = vmatmul.mubr.f32.gmra.mxu0 %v363
    %v365 = vpop.f32.mrf.mxu0
    %v366 = vadd.f32 %v284, %v365
    %v367 = vpop.f32.mrf.mxu0
    %368 = vmatprep.mubr.f32.mxu0 0.0
    %v369 = vand.u32 %v35, 4294901760
    %v370 = vsub.f32 %v35, %v369
    %v371 = vand.u32 %v370, 4294901760
    %372 = vmatmul.mubr.f32.gmra.mxu0 %v371
    %v373 = vpop.f32.mrf.mxu0
    %v374 = vadd.f32 %v291, %v373
    %v375 = vpop.f32.mrf.mxu0
    %376 = vdwg.mxu0
    %377 = vmatprep.subr.mxu0 0.0
    %378 = vmatpush1.msra.mxu0 0.0
    %379 = vmatprep.subr.mxu0 0.0
    %380 = vmatpush1.msra.mxu0 0.0
    %381 = vmatprep.subr.mxu0 0.0
    %382 = vmatpush1.msra.mxu0 0.0
    %383 = vmatprep.subr.mxu0 0.0
    %384 = vmatpush1.msra.mxu0 0.0
    %385 = vmatprep.subr.mxu0 0.0
    %386 = vmatpush1.msra.mxu0 0.0
    %387 = vmatprep.subr.mxu0 0.0
    %388 = vmatpush1.msra.mxu0 0.0
    %389 = vmatprep.subr.mxu0 0.0
    %390 = vmatpush1.msra.mxu0 0.0
    %391 = vmatprep.subr.mxu0 0.0
    %392 = vmatpush1.msra.mxu0 0.0
    %393 = vmatprep.subr.mxu0 0.0
    %394 = vmatpush1.msra.mxu0 0.0
    %395 = vmatprep.subr.mxu0 0.0
    %396 = vmatpush1.msra.mxu0 0.0
    %397 = vmatprep.subr.mxu0 0.0
    %398 = vmatpush1.msra.mxu0 0.0
    %399 = vmatprep.subr.mxu0 0.0
    %400 = vmatpush1.msra.mxu0 0.0
    %401 = vmatprep.subr.mxu0 0.0
    %402 = vmatpush1.msra.mxu0 0.0
    %403 = vmatprep.subr.mxu0 0.0
    %404 = vmatpush1.msra.mxu0 0.0
    %405 = vmatprep.subr.mxu0 0.0
    %v406 = vand.u32 %v29, 4294901760
    %v407 = vsub.f32 %v29, %v406
    %v408 = vand.u32 %v407, 4294901760
    %409 = vmatpush1.msra.mxu0 %v408
    %410 = vmatprep.subr.mxu0 0.0
    %v411 = vand.u32 %v28, 4294901760
    %v412 = vsub.f32 %v28, %v411
    %v413 = vand.u32 %v412, 4294901760
    %414 = vmatpush1.msra.mxu0 %v413
    %415 = vmatprep.subr.mxu0 0.0
    %416 = vmatpush2.msra.mxu0 0.0
    %417 = vmatprep.subr.mxu0 0.0
    %418 = vmatpush2.msra.mxu0 0.0
    %419 = vmatprep.subr.mxu0 0.0
    %420 = vmatpush2.msra.mxu0 0.0
    %421 = vmatprep.subr.mxu0 0.0
    %422 = vmatpush2.msra.mxu0 0.0
    %423 = vmatprep.subr.mxu0 0.0
    %424 = vmatpush2.msra.mxu0 0.0
    %425 = vmatprep.subr.mxu0 0.0
    %426 = vmatpush2.msra.mxu0 0.0
    %427 = vmatprep.subr.mxu0 0.0
    %428 = vmatpush2.msra.mxu0 0.0
    %429 = vmatprep.subr.mxu0 0.0
    %430 = vmatpush2.msra.mxu0 0.0
    %431 = vmatprep.subr.mxu0 0.0
    %432 = vmatpush2.msra.mxu0 0.0
    %433 = vmatprep.subr.mxu0 0.0
    %434 = vmatpush2.msra.mxu0 0.0
    %435 = vmatprep.subr.mxu0 0.0
    %436 = vmatpush2.msra.mxu0 0.0
    %437 = vmatprep.subr.mxu0 0.0
    %438 = vmatpush2.msra.mxu0 0.0
    %439 = vmatprep.subr.mxu0 0.0
    %440 = vmatpush2.msra.mxu0 0.0
    %441 = vmatprep.subr.mxu0 0.0
    %442 = vmatpush2.msra.mxu0 0.0
    %443 = vmatprep.subr.mxu0 0.0
    %444 = vmatpush2.msra.mxu0 0.0
    %445 = vmatprep.subr.mxu0 0.0
    %446 = vmatpush2.msra.mxu0 0.0
    %447 = vmatprep.mubr.f32.mxu0 0.0
    %v448 = vand.u32 %v32, 4294901760
    %449 = vmatmul.mubr.f32.gmra.mxu0 %v448
    %v450 = vpop.f32.mrf.mxu0
    %v451 = vadd.f32 %v366, %v450
    %v452 = vpop.f32.mrf.mxu0
    %453 = vmatprep.mubr.f32.mxu0 0.0
    %v454 = vand.u32 %v35, 4294901760
    %455 = vmatmul.mubr.f32.gmra.mxu0 %v454
    %v456 = vpop.f32.mrf.mxu0
    %v457 = vadd.f32 %v374, %v456
    %v458 = vpop.f32.mrf.mxu0
    %459 = vdwg.mxu0
    %460 = vmatprep.subr.mxu0 0.0
    %461 = vmatpush1.msra.mxu0 0.0
    %462 = vmatprep.subr.mxu0 0.0
    %463 = vmatpush1.msra.mxu0 0.0
    %464 = vmatprep.subr.mxu0 0.0
    %465 = vmatpush1.msra.mxu0 0.0
    %466 = vmatprep.subr.mxu0 0.0
    %467 = vmatpush1.msra.mxu0 0.0
    %468 = vmatprep.subr.mxu0 0.0
    %469 = vmatpush1.msra.mxu0 0.0
    %470 = vmatprep.subr.mxu0 0.0
    %471 = vmatpush1.msra.mxu0 0.0
    %472 = vmatprep.subr.mxu0 0.0
    %473 = vmatpush1.msra.mxu0 0.0
    %474 = vmatprep.subr.mxu0 0.0
    %475 = vmatpush1.msra.mxu0 0.0
    %476 = vmatprep.subr.mxu0 0.0
    %477 = vmatpush1.msra.mxu0 0.0
    %478 = vmatprep.subr.mxu0 0.0
    %479 = vmatpush1.msra.mxu0 0.0
    %480 = vmatprep.subr.mxu0 0.0
    %481 = vmatpush1.msra.mxu0 0.0
    %482 = vmatprep.subr.mxu0 0.0
    %483 = vmatpush1.msra.mxu0 0.0
    %484 = vmatprep.subr.mxu0 0.0
    %485 = vmatpush1.msra.mxu0 0.0
    %486 = vmatprep.subr.mxu0 0.0
    %487 = vmatpush1.msra.mxu0 0.0
    %488 = vmatprep.subr.mxu0 0.0
    %v489 = vand.u32 %v29, 4294901760
    %490 = vmatpush1.msra.mxu0 %v489
    %491 = vmatprep.subr.mxu0 0.0
    %v492 = vand.u32 %v28, 4294901760
    %493 = vmatpush1.msra.mxu0 %v492
    %494 = vmatprep.subr.mxu0 0.0
    %495 = vmatpush2.msra.mxu0 0.0
    %496 = vmatprep.subr.mxu0 0.0
    %497 = vmatpush2.msra.mxu0 0.0
    %498 = vmatprep.subr.mxu0 0.0
    %499 = vmatpush2.msra.mxu0 0.0
    %500 = vmatprep.subr.mxu0 0.0
    %501 = vmatpush2.msra.mxu0 0.0
    %502 = vmatprep.subr.mxu0 0.0
    %503 = vmatpush2.msra.mxu0 0.0
    %504 = vmatprep.subr.mxu0 0.0
    %505 = vmatpush2.msra.mxu0 0.0
    %506 = vmatprep.subr.mxu0 0.0
    %507 = vmatpush2.msra.mxu0 0.0
    %508 = vmatprep.subr.mxu0 0.0
    %509 = vmatpush2.msra.mxu0 0.0
    %510 = vmatprep.subr.mxu0 0.0
    %511 = vmatpush2.msra.mxu0 0.0
    %512 = vmatprep.subr.mxu0 0.0
    %513 = vmatpush2.msra.mxu0 0.0
    %514 = vmatprep.subr.mxu0 0.0
    %515 = vmatpush2.msra.mxu0 0.0
    %516 = vmatprep.subr.mxu0 0.0
    %517 = vmatpush2.msra.mxu0 0.0
    %518 = vmatprep.subr.mxu0 0.0
    %519 = vmatpush2.msra.mxu0 0.0
    %520 = vmatprep.subr.mxu0 0.0
    %521 = vmatpush2.msra.mxu0 0.0
    %522 = vmatprep.subr.mxu0 0.0
    %523 = vmatpush2.msra.mxu0 0.0
    %524 = vmatprep.subr.mxu0 0.0
    %525 = vmatpush2.msra.mxu0 0.0
    %526 = vmatprep.mubr.f32.mxu0 0.0
    %v527 = vand.u32 %v32, 4294901760
    %528 = vmatmul.mubr.f32.gmra.mxu0 %v527
    %v529 = vpop.f32.mrf.mxu0
    %v530 = vadd.f32 %v451, %v529
    %v531 = vpop.f32.mrf.mxu0
    %532 = vmatprep.mubr.f32.mxu0 0.0
    %v533 = vand.u32 %v35, 4294901760
    %534 = vmatmul.mubr.f32.gmra.mxu0 %v533
    %v535 = vpop.f32.mrf.mxu0
    %v536 = vadd.f32 %v457, %v535
    %v537 = vpop.f32.mrf.mxu0
    %538 = vdwg.mxu0
    %539 = vst [vmem:[#allocation2] sm:$0xff] %v530
    %540 = vst [vmem:[#allocation2 + $0x8] sm:$0xff] %v536
    // Predicated region
    $region10: #{tpu_custom_call.1} parent=1 // pred_check
      _
    $region11: #{tpu_custom_call.1} parent=1 // pred_check_branch
      %542 = sbr.rel (0) target = $region13
    $region12: #{tpu_custom_call.1} parent=1 // pred_region
      %s544 = ssub.s32 256, 256
      %545 = vsyncadd [#allocation3], %s544
      %s546 = sshll.u32 [#allocation2], 4
      %s547 = int_to_ptr.vmem [resolvable:$true] %s546
      %552 = dma.vmem_to_hbm [thread:$0]  %s547, 256, %s2, [#allocation3], 128, 128, 8
    $region13: #{tpu_custom_call.1} parent=1 // pred_fallthru
      _
    // Predicated region
    $region14: #{tpu_custom_call.1} parent=1 // pred_check
      _
    $region15: #{tpu_custom_call.1} parent=1 // pred_check_branch
      %554 = sbr.rel (0) target = $region17
    $region16: #{tpu_custom_call.1} parent=1 // pred_region
      %555 = dma.done [#allocation3], 256
    $region17: #{tpu_custom_call.1} parent=1 // pred_fallthru
      _
    %556 = vsyncpa [#allocation3], 1

</llo_original>
